<compile_context>
chip_gen: v7x
topology: tpu7x:2x2x1
jax: 0.10.0
libtpu: 0.0.40
codegen_flags: <defaults>
</compile_context>

<pallas_src>
import functools

import jax
import jax.numpy as jnp
from jax import lax
from jax.experimental import pallas as pl
from jax.experimental.pallas import tpu as pltpu


def _tcn_kernel(x_ref, w_ref, shift_ref, o_ref):
    # x_ref:     (K*C_in, tn)   bf16
    # w_ref:     (C_out, K*C_in) bf16 (BN scale already folded in)
    # shift_ref: (C_out, 1)     f32  (fused conv-bias + BN shift)
    # o_ref:     (C_out, tn)    f32
    acc = jnp.dot(w_ref[...], x_ref[...], preferred_element_type=jnp.float32)
    o_ref[...] = jnp.maximum(acc + shift_ref[...], 0.0).astype(o_ref.dtype)


def temporal_conv_network(h, params, *, stride, padding, kernel, eps=1e-5):
    """h: (N, M, T, V, C) float32 -> (N, M, T_out, V, C_out) float32."""
    N, M, T, V, C = h.shape
    conv_w = params["conv_w"]          # (C_out, C_in, K, 1)  (PyTorch OIHW)
    conv_b = params["conv_b"]          # (C_out,)
    gamma = params["bn_gamma"]         # (C_out,)
    beta = params["bn_beta"]           # (C_out,)
    rmean = params["bn_mean"]          # (C_out,)
    rvar = params["bn_var"]            # (C_out,)

    C_out, C_in, K, _ = conv_w.shape
    assert C_in == C and K == kernel

    # TODO(synk): nn.Dropout is eval-mode identity here (no train-mode mask).
    # permute (N,M,T,V,C) -> (N,M,C,T,V) -> (N*M, C, T, V)   [NCHW]
    x = jnp.transpose(h, (0, 1, 4, 2, 3)).reshape(N * M, C, T, V)
    # temporal padding
    x = jnp.pad(x, ((0, 0), (0, 0), (padding, padding), (0, 0)))
    T_pad = T + 2 * padding
    T_out = (T_pad - K) // stride + 1
    TV = T_out * V
    B = N * M
    BTV = B * TV
    KC = K * C_in

    # im2col over the temporal taps (wrapper glue).
    # TODO(synk): for production sizes (stride=1, large T/V/C), generate the
    # K taps in-kernel from the padded slab (pl.ds / pltpu.roll) instead of
    # materializing K shifted copies; at these toy shapes it is negligible.
    cols = [x[:, :, k:k + stride * (T_out - 1) + 1:stride, :] for k in range(K)]
    x_cols = jnp.stack(cols, axis=1).reshape(B, KC, TV)        # (B, K*C_in, TV)
    # fold batch into the lane axis: (K*C_in, B*TV), column = b*TV + t*V + v
    x_big = jnp.transpose(x_cols, (1, 0, 2)).reshape(KC, BTV)
    x_big = x_big.astype(jnp.bfloat16)

    # weights: (C_out, C_in, K) -> (C_out, K, C_in) -> (C_out, K*C_in)
    # row ordering k*C_in + c matches x_big's row ordering.
    w2 = jnp.transpose(conv_w[..., 0], (0, 2, 1)).reshape(C_out, KC)

    # fold conv bias + inference BN:
    #   y = scale*(W·x + b - mean) + beta = (scale*W)·x + (scale*(b-mean)+beta)
    scale = gamma / jnp.sqrt(rvar + eps)                        # (C_out,)
    w_scaled = (scale[:, None] * w2).astype(jnp.bfloat16)       # (C_out, K*C_in)
    shift = (scale * (conv_b - rmean) + beta).reshape(C_out, 1).astype(jnp.float32)

    # 2 lane-parallel grid steps when cleanly divisible (v7x dual-TC), else 1.
    grid_n = 2 if (BTV % 256 == 0) else 1
    tn = BTV // grid_n

    out = pl.pallas_call(
        _tcn_kernel,
        out_shape=jax.ShapeDtypeStruct((C_out, BTV), jnp.float32),
        grid_spec=pltpu.PrefetchScalarGridSpec(
            num_scalar_prefetch=0,
            grid=(grid_n,),
            in_specs=[
                pl.BlockSpec((KC, tn), lambda j: (0, j)),
                pl.BlockSpec((C_out, KC), lambda j: (0, 0)),
                pl.BlockSpec((C_out, 1), lambda j: (0, 0)),
            ],
            out_specs=pl.BlockSpec((C_out, tn), lambda j: (0, j)),
        ),
        compiler_params=pltpu.CompilerParams(
            dimension_semantics=("parallel",)),
    )(x_big, w_scaled, shift)

    # (C_out, B*TV) -> (C_out, N, M, T_out, V) -> (N, M, T_out, V, C_out)
    out = out.reshape(C_out, N, M, T_out, V)
    return jnp.transpose(out, (1, 2, 3, 4, 0))


def _reference(h, params, *, stride, padding, kernel, eps=1e-5):
    """Pure-JAX reference replicating the PyTorch forward (eval mode)."""
    N, M, T, V, C = h.shape
    conv_w = params["conv_w"]
    C_out = conv_w.shape[0]
    x = jnp.transpose(h, (0, 1, 4, 2, 3)).reshape(N * M, C, T, V)
    y = lax.conv_general_dilated(
        x, conv_w, window_strides=(stride, 1),
        padding=[(padding, padding), (0, 0)],
        dimension_numbers=("NCHW", "OIHW", "NCHW"))
    y = y + params["conv_b"].reshape(1, C_out, 1, 1)
    inv = params["bn_gamma"] / jnp.sqrt(params["bn_var"] + eps)
    y = (y - params["bn_mean"].reshape(1, C_out, 1, 1)) * inv.reshape(1, C_out, 1, 1)
    y = y + params["bn_beta"].reshape(1, C_out, 1, 1)
    y = jnp.maximum(y, 0.0)
    T_out = y.shape[2]
    y = y.reshape(N, M, C_out, T_out, V)
    return jnp.transpose(y, (0, 1, 3, 4, 2))


if __name__ == "__main__":
    # Module config (out_feats = 2*in_feats, consistent with the view() logic)
    N, M, T, V = 2, 2, 8, 16
    in_feats, out_feats = 4, 8
    kernel, stride, padding = 3, 1, 1

    key = jax.random.PRNGKey(0)
    k_h, k_w, k_b, k_g, k_be, k_m, k_v = jax.random.split(key, 7)

    h = jax.random.normal(k_h, (N, M, T, V, in_feats), dtype=jnp.float32)

    # conv_init: weight ~ N(0, sqrt(2 / (out_channels * prod(kernel_size))))
    std = (2.0 / (out_feats * kernel * 1)) ** 0.5
    params = {
        "conv_w": std * jax.random.normal(
            k_w, (out_feats, in_feats, kernel, 1), dtype=jnp.float32),
        "conv_b": 0.1 * jax.random.normal(k_b, (out_feats,), dtype=jnp.float32),
        "bn_gamma": 1.0 + 0.1 * jax.random.normal(k_g, (out_feats,), jnp.float32),
        "bn_beta": 0.1 * jax.random.normal(k_be, (out_feats,), jnp.float32),
        "bn_mean": 0.1 * jax.random.normal(k_m, (out_feats,), jnp.float32),
        "bn_var": 1.0 + 0.1 * jax.nn.softplus(
            jax.random.normal(k_v, (out_feats,), jnp.float32)),
    }

    out = temporal_conv_network(h, params, stride=stride, padding=padding,
                                kernel=kernel)
    out = jax.block_until_ready(out)

    ref = _reference(h, params, stride=stride, padding=padding, kernel=kernel)
    assert out.shape == (N, M, T, V, out_feats), out.shape
    # tolerance loosened vs f32-only version: matmul operands are bf16
    # (accumulation and epilogue remain f32).
    assert jnp.allclose(out, ref, atol=5e-2, rtol=5e-2), \
        float(jnp.max(jnp.abs(out - ref)))
    print("KERNEL_OK")
</pallas_src>

<mosaic_0001>
module attributes {stable_mosaic.version = 11 : i64} {
  func.func @_tcn_kernel(%arg0: i32, %arg1: memref<12x256xbf16, #tpu.memory_space<vmem>>, %arg2: memref<8x12xbf16, #tpu.memory_space<vmem>>, %arg3: memref<8x1xf32, #tpu.memory_space<vmem>>, %arg4: memref<8x256xf32, #tpu.memory_space<vmem>>) attributes {dimension_semantics = [#tpu.dimension_semantics<parallel>], iteration_bounds = array<i64: 2>, scalar_prefetch = 0 : i64, scratch_operands = 0 : i64, tpu.core_type = #tpu.core_type<tc>, window_params = [{transform_indices = @transform_0, window_bounds = array<i64: 12, 256>}, {pipeline_mode = #tpu.pipeline_mode<synchronous>, transform_indices = @transform_1, window_bounds = array<i64: 8, 12>}, {pipeline_mode = #tpu.pipeline_mode<synchronous>, transform_indices = @transform_2, window_bounds = array<i64: 8, 1>}, {transform_indices = @transform_3, window_bounds = array<i64: 8, 256>}]} {
    %c0 = arith.constant 0 : index
    %c0_0 = arith.constant 0 : index
    %0 = vector.load %arg2[%c0, %c0_0] : memref<8x12xbf16, #tpu.memory_space<vmem>>, vector<8x12xbf16>
    %c0_1 = arith.constant 0 : index
    %c0_2 = arith.constant 0 : index
    %1 = vector.load %arg1[%c0_1, %c0_2] : memref<12x256xbf16, #tpu.memory_space<vmem>>, vector<12x256xbf16>
    %cst = arith.constant dense<0.000000e+00> : vector<8x256xf32>
    %2 = tpu.matmul %0, %1, %cst {dimension_numbers = #tpu.dot_dimension_numbers<[1], [0], [0], [1], [0, 0, 1, 1], [], []>} : vector<8x12xbf16>, vector<12x256xbf16>, vector<8x256xf32> -> vector<8x256xf32>
    %c0_3 = arith.constant 0 : index
    %c0_4 = arith.constant 0 : index
    %3 = vector.load %arg3[%c0_3, %c0_4] : memref<8x1xf32, #tpu.memory_space<vmem>>, vector<8x1xf32>
    %4 = vector.broadcast %3 : vector<8x1xf32> to vector<8x256xf32>
    %5 = arith.addf %2, %4 : vector<8x256xf32>
    %cst_5 = arith.constant 0.000000e+00 : f32
    %6 = vector.broadcast %cst_5 : f32 to vector<8x256xf32>
    %7 = arith.maximumf %5, %6 : vector<8x256xf32>
    %c0_6 = arith.constant 0 : index
    %c0_7 = arith.constant 0 : index
    %8 = vector.load %arg4[%c0_6, %c0_7] : memref<8x256xf32, #tpu.memory_space<vmem>>, vector<8x256xf32>
    tpu.vector_store %arg4[%c0_6, %c0_7], %7 {strides = array<i32>} : memref<8x256xf32, #tpu.memory_space<vmem>>, vector<8x256xf32>,
    return
  }
  func.func @transform_0(%arg0: i32) -> (i32, i32) {
    %c0_i32 = arith.constant 0 : i32
    %c0_i32_0 = arith.constant 0 : i32
    return %c0_i32, %arg0 : i32, i32
  }
  func.func @transform_1(%arg0: i32) -> (i32, i32) {
    %c0_i32 = arith.constant 0 : i32
    %c0_i32_0 = arith.constant 0 : i32
    %c0_i32_1 = arith.constant 0 : i32
    return %c0_i32, %c0_i32_0 : i32, i32
  }
  func.func @transform_2(%arg0: i32) -> (i32, i32) {
    %c0_i32 = arith.constant 0 : i32
    %c0_i32_0 = arith.constant 0 : i32
    %c0_i32_1 = arith.constant 0 : i32
    return %c0_i32, %c0_i32_0 : i32, i32
  }
  func.func @transform_3(%arg0: i32) -> (i32, i32) {
    %c0_i32 = arith.constant 0 : i32
    %c0_i32_0 = arith.constant 0 : i32
    return %c0_i32, %arg0 : i32, i32
  }
}

</mosaic_0001>

<llo_original>
// kernel: tpu_custom_call.1
$region0: #{tpu_custom_call.1}
  #allocation0 [shape = 'u32[]', space=smem, size = 0x4, offset = 0x4, fixed_abs, tag = 'smem constant byte address 0x4 - core index']
  #allocation1 [shape = 'u32[144,128]{1,0:T(1,128)}', space=vmem, size = 0x12000, scoped, tag = 'internal scratch']
  %s0 = inlined_call_operand.hbm [shape: bf16[12,512], index: 0, kind: input, shape index: {}]
  %s1 = inlined_call_operand.vmem [shape: bf16[8,12], index: 1, kind: input, shape index: {}]
  %s2 = inlined_call_operand.vmem [shape: f32[8,1], index: 2, kind: input, shape index: {}]
  %s3 = inlined_call_operand.hbm [shape: f32[8,512], index: 3, kind: output, shape index: {}]
  %s4 = sld [smem:[#allocation0]]
  $region49: #{tpu_custom_call.1} parent=0
    _
  %s6 = ssub.s32 1, %s4
  %s7 = scalar_select 0, %s6, %s4
  $region1: #{tpu_custom_call.1} parent=0
    #allocation2 [shape = 'u8[16384]{0}', space=vmem, size = 0x4000, scoped, tag = 'input window, operand 0']
    #allocation3 [shape = 's32[2]{0}', space=sflag, size = 0x8, scoped, tag = 'scoped memory for tpu_custom_call.1']
    #allocation4 [shape = 's32[2]{0}', space=sflag, size = 0x8, scoped, tag = 'scoped memory for tpu_custom_call.1']
    #allocation5 [shape = 'u8[16384]{0}', space=vmem, size = 0x4000, scoped, tag = 'output window, operand 0']
    %8 = vsyncpa [#allocation3], 0
    %s9 = scalar_lea.sflag [#allocation3], 1
    %10 = vsyncpa %s9, 0
    %11 = vsyncpa [#allocation4], 0
    %s12 = scalar_lea.sflag [#allocation4], 1
    %13 = vsyncpa %s12, 0
    loop: start=0, step=1, limit=4
    $region2: #{tpu_custom_call.1} parent=1 // loop_pre_header
      _
    $region3: #{tpu_custom_call.1} parent=1 // loop_header
      %s15 = sphi 0, %s19
      %p16 = scmp.ge.s32.totalorder %s15, 4
      %s25 = sphi 0, %s27
      %s28 = sphi 0, %s25
      %s29 = sphi 0, %s28
      %s45 = sphi 0, %s29
      %s49 = sphi 0, %s49
      %s51 = sphi 0, %s49
      %s52 = sphi 0, %s51
      %s66 = sphi 0, %s52
      %s70 = sphi 0, %s70
      %s72 = sphi 0, %s70
      %s73 = sphi 0, %s72
      %s87 = sphi 0, %s73
      %s93 = sphi 0, %s95
      %s96 = sphi 0, %s93
      %s97 = sphi 0, %s96
      %s113 = sphi 0, %s97
    $region4: #{tpu_custom_call.1} parent=1 // loop_header_branch
      %18 = sbr.rel (%p16) target = $region8
    $region5: #{tpu_custom_call.1} parent=1 // loop_body
      %s20 = ssub.s32 %s15, 1
      %s21 = ssub.s32 %s15, 2
      %s22 = sadd.s32 %s15, 1
      %s23 = ssub.s32 %s15, %s22
      %p24 = scmp.eq.s32.totalorder %s23, 0
      %s26 = sadd.s32 %s25, 1
      %s27 = scalar_select %p24, %s25, %s26
      %p30 = pneg %p24
      %p31 = scmp.eq.s32.totalorder %s15, 1
      %p32 = por %p30, %p31
      %p33 = scmp.ne.s32.totalorder %s25, %s28
      %p34 = scmp.eq.s32.totalorder %s15, 0
      %p35 = por %p33, %p34
      %p36 = scmp.ne.s32.totalorder %s25, %s28
      %p37 = scmp.eq.s32.totalorder %s20, 1
      %p38 = por %p36, %p37
      %p39 = scmp.ne.s32.totalorder %s28, %s29
      %p40 = scmp.eq.s32.totalorder %s20, 0
      %p41 = por %p39, %p40
      %p42 = scmp.ne.s32.totalorder %s28, %s29
      %p43 = scmp.eq.s32.totalorder %s21, 1
      %p44 = por %p42, %p43
      %p46 = scmp.ne.s32.totalorder %s29, %s45
      %p47 = scmp.eq.s32.totalorder %s21, 0
      %p48 = por %p46, %p47
      %s50 = sadd.s32 %s49, 1
      %p53 = scmp.eq.s32.totalorder %s15, 1
      %p54 = scmp.ne.s32.totalorder %s49, %s51
      %p55 = scmp.eq.s32.totalorder %s15, 0
      %p56 = por %p54, %p55
      %p57 = scmp.ne.s32.totalorder %s49, %s51
      %p58 = scmp.eq.s32.totalorder %s20, 1
      %p59 = por %p57, %p58
      %p60 = scmp.ne.s32.totalorder %s51, %s52
      %p61 = scmp.eq.s32.totalorder %s20, 0
      %p62 = por %p60, %p61
      %p63 = scmp.ne.s32.totalorder %s51, %s52
      %p64 = scmp.eq.s32.totalorder %s21, 1
      %p65 = por %p63, %p64
      %p67 = scmp.ne.s32.totalorder %s52, %s66
      %p68 = scmp.eq.s32.totalorder %s21, 0
      %p69 = por %p67, %p68
      %s71 = sadd.s32 %s70, 1
      %p74 = scmp.eq.s32.totalorder %s15, 1
      %p75 = scmp.ne.s32.totalorder %s70, %s72
      %p76 = scmp.eq.s32.totalorder %s15, 0
      %p77 = por %p75, %p76
      %p78 = scmp.ne.s32.totalorder %s70, %s72
      %p79 = scmp.eq.s32.totalorder %s20, 1
      %p80 = por %p78, %p79
      %p81 = scmp.ne.s32.totalorder %s72, %s73
      %p82 = scmp.eq.s32.totalorder %s20, 0
      %p83 = por %p81, %p82
      %p84 = scmp.ne.s32.totalorder %s72, %s73
      %p85 = scmp.eq.s32.totalorder %s21, 1
      %p86 = por %p84, %p85
      %p88 = scmp.ne.s32.totalorder %s73, %s87
      %p89 = scmp.eq.s32.totalorder %s21, 0
      %p90 = por %p88, %p89
      %s91 = ssub.s32 %s15, %s22
      %p92 = scmp.eq.s32.totalorder %s91, 0
      %s94 = sadd.s32 %s93, 1
      %s95 = scalar_select %p92, %s93, %s94
      %p98 = pneg %p92
      %p99 = scmp.eq.s32.totalorder %s15, 1
      %p100 = por %p98, %p99
      %p101 = scmp.ne.s32.totalorder %s93, %s96
      %p102 = scmp.eq.s32.totalorder %s15, 0
      %p103 = por %p101, %p102
      %p104 = scmp.ne.s32.totalorder %s93, %s96
      %p105 = scmp.eq.s32.totalorder %s20, 1
      %p106 = por %p104, %p105
      %p107 = scmp.ne.s32.totalorder %s96, %s97
      %p108 = scmp.eq.s32.totalorder %s20, 0
      %p109 = por %p107, %p108
      %p110 = scmp.ne.s32.totalorder %s96, %s97
      %p111 = scmp.eq.s32.totalorder %s21, 1
      %p112 = por %p110, %p111
      %p114 = scmp.ne.s32.totalorder %s97, %s113
      %p115 = scmp.eq.s32.totalorder %s21, 0
      %p116 = por %p114, %p115
      %p117 = scmp.le.s32.totalorder 1, %s15
      %p118 = scmp.lt.s32.totalorder %s15, 3
      %p119 = pnand %p117, %p118
      %p120 = pneg %p119
      // Predicated region
      $region9: #{tpu_custom_call.1} parent=5 // pred_check
        _
      $region10: #{tpu_custom_call.1} parent=5 // pred_check_branch
        %122 = sbr.rel (%p119) target = $region12
      $region11: #{tpu_custom_call.1} parent=5 // pred_region
        %s123 = ssub.s32 %s15, 1
        // Predicated region
        $region13: #{tpu_custom_call.1} parent=11 // pred_check
          %p124 = pneg %p62
        $region14: #{tpu_custom_call.1} parent=11 // pred_check_branch
          %126 = sbr.rel (%p124) target = $region16
        $region15: #{tpu_custom_call.1} parent=11 // pred_region
          _
        $region16: #{tpu_custom_call.1} parent=11 // pred_fallthru
          _
        // Predicated region
        $region17: #{tpu_custom_call.1} parent=11 // pred_check
          %p127 = pneg %p83
        $region18: #{tpu_custom_call.1} parent=11 // pred_check_branch
          %129 = sbr.rel (%p127) target = $region20
        $region19: #{tpu_custom_call.1} parent=11 // pred_region
          _
        $region20: #{tpu_custom_call.1} parent=11 // pred_fallthru
          _
      $region12: #{tpu_custom_call.1} parent=5 // pred_fallthru
        _
      %p130 = scmp.lt.s32.totalorder %s15, 2
      // Predicated region
      $region21: #{tpu_custom_call.1} parent=5 // pred_check
        %p131 = pneg %p130
      $region22: #{tpu_custom_call.1} parent=5 // pred_check_branch
        %133 = sbr.rel (%p131) target = $region24
      $region23: #{tpu_custom_call.1} parent=5 // pred_region
        // Predicated region
        $region25: #{tpu_custom_call.1} parent=23 // pred_check
          %p134 = pneg %p35
        $region26: #{tpu_custom_call.1} parent=23 // pred_check_branch
          %136 = sbr.rel (%p134) target = $region28
        $region27: #{tpu_custom_call.1} parent=23 // pred_region
          %s137 = sand.u32 %s25, 1
          %s138 = scalar_lea.sflag [#allocation3], %s137
          %s139 = sand.u32 %s25, 1
          %s140 = smul.addr %s139, 16
          %s141 = scalar_lea.vmem [#allocation2], %s140
          %s142 = smul.u32 2, %s15
          %s144 = ssub.s32 256, 256
          %145 = vsyncadd %s138, %s144
          %s146 = smul.addr %s142, 64
          %s147 = scalar_lea.hbm %s0, %s146
          %s148 = sshll.u32 %s141, 4
          %s149 = int_to_ptr.vmem [resolvable:$true] %s148
          %154 = dma.hbm_to_vmem [thread:$0]  %s147, 256, %s149, %s138, 256, 128, 8
        $region28: #{tpu_custom_call.1} parent=23 // pred_fallthru
          _
      $region24: #{tpu_custom_call.1} parent=5 // pred_fallthru
        _
      %p155 = scmp.le.s32.totalorder 1, %s15
      %p156 = scmp.lt.s32.totalorder %s15, 3
      %p157 = pnand %p155, %p156
      %p158 = pneg %p157
      // Predicated region
      $region29: #{tpu_custom_call.1} parent=5 // pred_check
        _
      $region30: #{tpu_custom_call.1} parent=5 // pred_check_branch
        %160 = sbr.rel (%p157) target = $region32
      $region31: #{tpu_custom_call.1} parent=5 // pred_region
        %s161 = ssub.s32 %s15, 1
        %s162 = sand.u32 %s28, 1
        %s163 = scalar_lea.sflag [#allocation3], %s162
        %s164 = sand.u32 %s28, 1
        %s165 = smul.addr %s164, 16
        %s166 = scalar_lea.vmem [#allocation2], %s165
        // Predicated region
        $region33: #{tpu_custom_call.1} parent=31 // pred_check
          %p167 = pneg %p41
        $region34: #{tpu_custom_call.1} parent=31 // pred_check_branch
          %169 = sbr.rel (%p167) target = $region36
        $region35: #{tpu_custom_call.1} parent=31 // pred_region
          %170 = dma.done %s163, 256
        $region36: #{tpu_custom_call.1} parent=31 // pred_fallthru
          _
        %s171 = sand.u32 %s28, 1
        %s172 = scalar_lea.sflag [#allocation3], %s171
        %s173 = sand.u32 %s28, 1
        %s174 = smul.addr %s173, 16
        %s175 = scalar_lea.vmem [#allocation2], %s174
        %p176 = pneg %p41
        %p177 = pneg %p38
        %p178 = pneg %p62
        %p179 = pneg %p59
        %p180 = pneg %p83
        %p181 = pneg %p80
        %p182 = pneg %p109
        %p183 = pneg %p106
        %s184 = sand.u32 %s96, 1
        %s185 = scalar_lea.sflag [#allocation4], %s184
        %s186 = sand.u32 %s96, 1
        %s187 = smul.addr %s186, 16
        %s188 = scalar_lea.vmem [#allocation5], %s187
        %s189 = smul.u32 2, %s20
        %s190 = smul.u32 2, %s20
        %v192 = vld [vmem:[%s1] sm:$0xf]
        %v193 = vld [vmem:[%s166] sm:$0xff]
        %v194 = vld [vmem:[%s166 + $0x8] sm:$0x33]
        %v195 = vld [vmem:[%s2] sm:$0xff]
        %197 = vset.pattern.permute.xlu0 0
        %198 = vperm.xlu0 %197, %v195
        %v199 = vpop.permute.xlu0 %198
        %v203 = vunpack.c.l.b16 %v193
        %v204 = vunpack.c.h.b16 %v193
        %v205 = vunpack.c.l.b16 %v194
        %v206 = vunpack.c.h.b16 %v194
        %v207 = vpack.c.b16 %v205, %v203
        %v208 = vpack.c.b16 %v206, %v204
        %vm209 = vcmask 97280
        %v211 = vsel %vm209, %v192, 0
        %vm213 = vcmask 1045504
        %v215 = vsel %vm213, %v207, 0
        %v218 = vsel %vm213, %v208, 0
        %220 = vmatprep.subr.bf16.mxu0 %v218
        %221 = vmatpush1.bf16.msra.mxu0 %v215
        %222 = vmatprep.subr.bf16.mxu0 0
        %223 = vmatpush1.bf16.msra.mxu0 0
        %224 = vmatprep.subr.bf16.mxu0 0
        %225 = vmatpush1.bf16.msra.mxu0 0
        %226 = vmatprep.subr.bf16.mxu0 0
        %227 = vmatpush1.bf16.msra.mxu0 0
        %228 = vmatprep.subr.bf16.mxu0 0
        %229 = vmatpush1.bf16.msra.mxu0 0
        %230 = vmatprep.subr.bf16.mxu0 0
        %231 = vmatpush1.bf16.msra.mxu0 0
        %232 = vmatprep.subr.bf16.mxu0 0
        %233 = vmatpush1.bf16.msra.mxu0 0
        %234 = vmatprep.subr.bf16.mxu0 0
        %235 = vmatpush1.bf16.msra.mxu0 0
        %236 = vmatprep.subr.bf16.mxu0 0
        %237 = vmatpush1.bf16.msra.mxu0 0
        %238 = vmatprep.subr.bf16.mxu0 0
        %239 = vmatpush1.bf16.msra.mxu0 0
        %240 = vmatprep.subr.bf16.mxu0 0
        %241 = vmatpush1.bf16.msra.mxu0 0
        %242 = vmatprep.subr.bf16.mxu0 0
        %243 = vmatpush1.bf16.msra.mxu0 0
        %244 = vmatprep.subr.bf16.mxu0 0
        %245 = vmatpush1.bf16.msra.mxu0 0
        %246 = vmatprep.subr.bf16.mxu0 0
        %247 = vmatpush1.bf16.msra.mxu0 0
        %248 = vmatprep.subr.bf16.mxu0 0
        %249 = vmatpush1.bf16.msra.mxu0 0
        %250 = vmatprep.subr.bf16.mxu0 0
        %251 = vmatpush1.bf16.msra.mxu0 0
        %252 = vmatprep.mubr.bf16.mxu0 0
        %253 = vmatmul.mubr.bf16.gmra.mrb[0].mxu0 %v211
        %v254 = vpop.f32.mrb[0].mxu0
        %v255 = vadd.f32 %v199, %v254
        %v256 = vpop.f32.mrb[0].mxu0
        %v257 = vadd.f32 %v199, %v256
        %v258 = vpop.f32.mrb[0].mxu0
        %v259 = vpop.f32.mrb[0].mxu0
        %260 = vdwg.mxu0
        %v261 = vmax.f32 %v255, 0.0
        %v262 = vmax.f32 %v257, 0.0
        %263 = vst [vmem:[%s188] sm:$0xff] %v261
        %264 = vst [vmem:[%s188 + $0x8] sm:$0xff] %v262
        %s265 = sand.u32 %s96, 1
        %s266 = scalar_lea.sflag [#allocation4], %s265
        %s267 = sand.u32 %s96, 1
        %s268 = smul.addr %s267, 16
        %s269 = scalar_lea.vmem [#allocation5], %s268
        // Predicated region
        $region37: #{tpu_custom_call.1} parent=31 // pred_check
          %p270 = pneg %p106
        $region38: #{tpu_custom_call.1} parent=31 // pred_check_branch
          %272 = sbr.rel (%p270) target = $region40
        $region39: #{tpu_custom_call.1} parent=31 // pred_region
          %s273 = smul.u32 2, %s20
          %s275 = ssub.s32 256, 256
          %276 = vsyncadd %s266, %s275
          %s277 = smul.addr %s273, 128
          %s278 = scalar_lea.hbm %s3, %s277
          %s280 = sshll.u32 %s269, 4
          %s281 = int_to_ptr.vmem [resolvable:$true] %s280
          %283 = dma.vmem_to_hbm [thread:$0]  %s281, 256, %s278, %s266
        $region40: #{tpu_custom_call.1} parent=31 // pred_fallthru
          _
      $region32: #{tpu_custom_call.1} parent=5 // pred_fallthru
        _
      %p284 = scmp.le.s32.totalorder 2, %s15
      // Predicated region
      $region41: #{tpu_custom_call.1} parent=5 // pred_check
        %p285 = pneg %p284
      $region42: #{tpu_custom_call.1} parent=5 // pred_check_branch
        %287 = sbr.rel (%p285) target = $region44
      $region43: #{tpu_custom_call.1} parent=5 // pred_region
        %s288 = ssub.s32 %s15, 2
        // Predicated region
        $region45: #{tpu_custom_call.1} parent=43 // pred_check
          %p289 = pneg %p112
        $region46: #{tpu_custom_call.1} parent=43 // pred_check_branch
          %291 = sbr.rel (%p289) target = $region48
        $region47: #{tpu_custom_call.1} parent=43 // pred_region
          %s292 = sand.u32 %s97, 1
          %s293 = scalar_lea.sflag [#allocation4], %s292
          %s294 = sand.u32 %s97, 1
          %s295 = smul.addr %s294, 16
          %s296 = scalar_lea.vmem [#allocation5], %s295
          %297 = dma.done %s293, 256
        $region48: #{tpu_custom_call.1} parent=43 // pred_fallthru
          _
      $region44: #{tpu_custom_call.1} parent=5 // pred_fallthru
        _
    $region6: #{tpu_custom_call.1} parent=1 // loop_footer
      %s19 = sadd.s32 1, %s15
    $region7: #{tpu_custom_call.1} parent=1 // loop_footer_branch
      %14 = sbr.rel target = $region3
    $region8: #{tpu_custom_call.1} parent=1 // loop_exit
      _
    %298 = vsyncpa [#allocation3], 1
    %s299 = scalar_lea.sflag [#allocation3], 1
    %300 = vsyncpa %s299, 1
    %301 = vsyncpa [#allocation4], 1
    %s302 = scalar_lea.sflag [#allocation4], 1
    %303 = vsyncpa %s302, 1

</llo_original>
